<compile_context>
chip_gen: v7x
topology: tpu7x:2x2x1
jax: 0.10.0
libtpu: 0.0.40
codegen_flags: <defaults>
</compile_context>

<pallas_src>
import functools

import jax
import jax.numpy as jnp
from jax.experimental import pallas as pl
from jax.experimental.pallas import tpu as pltpu


# ---------------------------------------------------------------------------
# Fast path: whole (TB, C, HW) samples resident in VMEM, grid over batch only.
# ---------------------------------------------------------------------------
def _channel_gate_kernel(x_ref, w1t_ref, b1_ref, w2t_ref, b2_ref, o_ref, *,
                         inv_hw, tb):
    x = x_ref[...]                                        # (TB, C, HW), io dtype
    c = x.shape[1]

    # Pooling: only the (TB, C) pooled vectors live in f32 (no full-tile cast).
    s = jnp.sum(x, axis=-1, dtype=jnp.float32)            # (TB, C)
    mx = jnp.max(x, axis=-1).astype(jnp.float32)          # (TB, C)
    avg = s * inv_hw

    # Shared MLP, both branches at once: two plain 2D MXU matmuls.
    pooled = jnp.concatenate([avg, mx], axis=0)           # (2TB, C)
    h = jnp.dot(pooled, w1t_ref[...], preferred_element_type=jnp.float32)
    h = jnp.maximum(h + b1_ref[...], 0.0)                 # (2TB, Hid)
    z = jnp.dot(h, w2t_ref[...], preferred_element_type=jnp.float32)  # (2TB, C)

    # Each branch carries one b2 in the PyTorch module -> 2*b2 total.
    att = z.reshape(2, tb, c).sum(axis=0) + 2.0 * b2_ref[...]         # (TB, C)
    scale = jax.nn.sigmoid(att).astype(x.dtype)           # (TB, C)

    # Elementwise path stays in the input dtype (HBM-roofline path).
    o_ref[...] = x * scale[:, :, None]


# ---------------------------------------------------------------------------
# Fallback path (sample too big for VMEM): phase A pools + runs the MLP while
# tiling HW (reduction axis last, 'arbitrary'); phase B re-reads x and scales.
# ---------------------------------------------------------------------------
def _pool_mlp_kernel(x_ref, w1t_ref, b1_ref, w2t_ref, b2_ref, scale_ref,
                     sum_ref, max_ref, *, inv_hw, hw, thw, mask_tail):
    j = pl.program_id(1)
    x = x_ref[...]                                        # (1, C, THW)

    if mask_tail:
        # Small (1, 1, THW) lane mask; broadcast happens in the select.
        lane = jax.lax.broadcasted_iota(jnp.int32, (1, 1, thw), 2)
        valid = lane < (hw - j * thw)
        xs = jnp.where(valid, x, jnp.zeros((), x.dtype))
        xm = jnp.where(valid, x, jnp.full((), -jnp.inf, x.dtype))
    else:
        xs = x
        xm = x

    psum = jnp.sum(xs, axis=-1, dtype=jnp.float32)        # (1, C)
    pmax = jnp.max(xm, axis=-1).astype(jnp.float32)       # (1, C)

    @pl.when(j == 0)
    def _():
        sum_ref[...] = jnp.zeros_like(sum_ref)
        max_ref[...] = jnp.full_like(max_ref, -jnp.inf)

    sum_ref[...] = sum_ref[...] + psum
    max_ref[...] = jnp.maximum(max_ref[...], pmax)

    @pl.when(j == pl.num_programs(1) - 1)
    def _():
        c = sum_ref.shape[1]
        pooled = jnp.concatenate([sum_ref[...] * inv_hw, max_ref[...]], axis=0)
        h = jnp.dot(pooled, w1t_ref[...], preferred_element_type=jnp.float32)
        h = jnp.maximum(h + b1_ref[...], 0.0)              # (2, Hid)
        z = jnp.dot(h, w2t_ref[...], preferred_element_type=jnp.float32)  # (2, C)
        att = z.sum(axis=0, keepdims=True) + 2.0 * b2_ref[...]            # (1, C)
        scale_ref[...] = jax.nn.sigmoid(att).reshape(1, c, 1)


def _scale_kernel(x_ref, scale_ref, o_ref):
    x = x_ref[...]                                        # (1, C, THW)
    o_ref[...] = x * scale_ref[...].astype(x.dtype)       # (1, C, 1) lane-bcast


# ---------------------------------------------------------------------------
# Wrapper
# ---------------------------------------------------------------------------
def channel_gate(x, w1, b1, w2, b2, *, io_budget_bytes=None):
    """x: (B, C, H, W). w1: (Hid, C), b1: (Hid,), w2: (C, Hid), b2: (C,)
    (PyTorch nn.Linear stores weight as (out_features, in_features))."""
    B, C, H, W = x.shape
    Hid = w1.shape[0]
    HW = H * W

    x_flat = x.reshape(B, C, HW)
    io_dtype = x_flat.dtype
    itemsize = jnp.dtype(io_dtype).itemsize

    # MLP parameters are tiny: keep them f32, pre-transposed for 2D matmuls,
    # biases lane-major.
    w1t = jnp.asarray(w1, jnp.float32).T                  # (C, Hid)
    w2t = jnp.asarray(w2, jnp.float32).T                  # (Hid, C)
    b1r = jnp.asarray(b1, jnp.float32).reshape(1, Hid)
    b2r = jnp.asarray(b2, jnp.float32).reshape(1, C)

    # Generation-aware VMEM budgets (v7x: 64 MiB physical, 2 TCs).
    try:
        kind = jax.devices()[0].device_kind.lower()
    except Exception:
        kind = ""
    is_v7 = "v7" in kind
    vmem_cap = (48 << 20) if is_v7 else (100 << 20)
    io_budget = io_budget_bytes if io_budget_bytes is not None else \
        ((40 << 20) if is_v7 else (80 << 20))

    bytes_per_sample = C * HW * itemsize

    def vmem_limit(tile_bytes):
        return int(min(vmem_cap, max(32 << 20, 4 * tile_bytes + (8 << 20))))

    weight_specs_1d = [
        pl.BlockSpec((C, Hid), lambda i: (0, 0)),
        pl.BlockSpec((1, Hid), lambda i: (0, 0)),
        pl.BlockSpec((Hid, C), lambda i: (0, 0)),
        pl.BlockSpec((1, C), lambda i: (0, 0)),
    ]

    if 4 * bytes_per_sample <= io_budget:
        # ---------------- fast path ----------------
        tb_cap = max(1, min(B, io_budget // (4 * bytes_per_sample)))
        tb = tb_cap
        if is_v7 and B >= 2:
            # Prefer an even number of grid steps so both TensorCores balance.
            best = None
            for cand in range(tb_cap, 0, -1):
                steps = -(-B // cand)
                if steps >= 2 and steps % 2 == 0:
                    best = cand
                    break
            tb = best if best is not None else max(1, min(tb_cap, -(-B // 2)))
        grid = (-(-B // tb),)

        kernel = functools.partial(_channel_gate_kernel, inv_hw=1.0 / HW, tb=tb)
        out_flat = pl.pallas_call(
            kernel,
            out_shape=jax.ShapeDtypeStruct((B, C, HW), io_dtype),
            grid_spec=pltpu.PrefetchScalarGridSpec(
                num_scalar_prefetch=0,
                grid=grid,
                in_specs=[pl.BlockSpec((tb, C, HW), lambda i: (i, 0, 0))]
                         + weight_specs_1d,
                out_specs=pl.BlockSpec((tb, C, HW), lambda i: (i, 0, 0)),
            ),
            compiler_params=pltpu.CompilerParams(
                dimension_semantics=("parallel",),
                vmem_limit_bytes=vmem_limit(tb * bytes_per_sample)),
        )(x_flat, w1t, b1r, w2t, b2r)
        return out_flat.reshape(B, C, H, W)

    # ---------------- fallback: tile HW (3 passes over x) ----------------
    thw = (io_budget // (4 * C * itemsize)) // 128 * 128
    thw = max(128, thw)
    if thw >= HW:
        thw = HW
    nhw = -(-HW // thw)
    mask_tail = (HW % thw) != 0
    tile_bytes = C * thw * itemsize

    weight_specs_2d = [
        pl.BlockSpec((C, Hid), lambda i, j: (0, 0)),
        pl.BlockSpec((1, Hid), lambda i, j: (0, 0)),
        pl.BlockSpec((Hid, C), lambda i, j: (0, 0)),
        pl.BlockSpec((1, C), lambda i, j: (0, 0)),
    ]

    pool_kernel = functools.partial(
        _pool_mlp_kernel, inv_hw=1.0 / HW, hw=HW, thw=thw, mask_tail=mask_tail)

    scale = pl.pallas_call(
        pool_kernel,
        out_shape=jax.ShapeDtypeStruct((B, C, 1), jnp.float32),
        grid_spec=pltpu.PrefetchScalarGridSpec(
            num_scalar_prefetch=0,
            grid=(B, nhw),
            in_specs=[pl.BlockSpec((1, C, thw), lambda i, j: (i, 0, j))]
                     + weight_specs_2d,
            out_specs=pl.BlockSpec((1, C, 1), lambda i, j: (i, 0, 0)),
            scratch_shapes=[pltpu.VMEM((1, C), jnp.float32),
                            pltpu.VMEM((1, C), jnp.float32)],
        ),
        compiler_params=pltpu.CompilerParams(
            dimension_semantics=("parallel", "arbitrary"),
            vmem_limit_bytes=vmem_limit(tile_bytes)),
    )(x_flat, w1t, b1r, w2t, b2r)

    out_flat = pl.pallas_call(
        _scale_kernel,
        out_shape=jax.ShapeDtypeStruct((B, C, HW), io_dtype),
        grid_spec=pltpu.PrefetchScalarGridSpec(
            num_scalar_prefetch=0,
            grid=(B, nhw),
            in_specs=[
                pl.BlockSpec((1, C, thw), lambda i, j: (i, 0, j)),
                pl.BlockSpec((1, C, 1), lambda i, j: (i, 0, 0)),
            ],
            out_specs=pl.BlockSpec((1, C, thw), lambda i, j: (i, 0, j)),
        ),
        compiler_params=pltpu.CompilerParams(
            dimension_semantics=("parallel", "parallel"),
            vmem_limit_bytes=vmem_limit(tile_bytes)),
    )(x_flat, scale)
    return out_flat.reshape(B, C, H, W)


def reference_channel_gate(x, w1, b1, w2, b2):
    """Pure-JAX reference mirroring the PyTorch forward."""
    avg = jnp.mean(x, axis=(2, 3))                 # (B, C)
    mx = jnp.max(x, axis=(2, 3))                   # (B, C)

    def mlp(v):                                    # v: (B, C)
        h = jnp.maximum(v @ w1.T + b1, 0.0)
        return h @ w2.T + b2

    att = mlp(avg) + mlp(mx)                       # (B, C)
    scale = jax.nn.sigmoid(att)[:, :, None, None]
    return x * scale


if __name__ == "__main__":
    key = jax.random.PRNGKey(0)

    def make_params(k, C, Hid):
        k1, k2, k3, k4 = jax.random.split(k, 4)
        bound1 = 1.0 / (C ** 0.5)
        w1 = jax.random.uniform(k1, (Hid, C), minval=-bound1, maxval=bound1,
                                dtype=jnp.float32)
        b1 = jax.random.uniform(k2, (Hid,), minval=-bound1, maxval=bound1,
                                dtype=jnp.float32)
        bound2 = 1.0 / (Hid ** 0.5)
        w2 = jax.random.uniform(k3, (C, Hid), minval=-bound2, maxval=bound2,
                                dtype=jnp.float32)
        b2 = jax.random.uniform(k4, (C,), minval=-bound2, maxval=bound2,
                                dtype=jnp.float32)
        return w1, b1, w2, b2

    # Test 1: fast path, HW a multiple of 128 (C=32, reduction_ratio=16 -> Hid=2).
    kx, kp, key = jax.random.split(key, 3)
    B, C, H, W = 2, 32, 16, 16
    Hid = C // 16
    x = jax.random.normal(kx, (B, C, H, W), dtype=jnp.float32)
    w1, b1, w2, b2 = make_params(kp, C, Hid)
    out = channel_gate(x, w1, b1, w2, b2)
    jax.block_until_ready(out)
    ref = reference_channel_gate(x, w1, b1, w2, b2)
    assert out.shape == (B, C, H, W)
    assert jnp.allclose(out, ref, atol=1e-5, rtol=1e-5), "mismatch (test 1)"

    # Test 2: HW not a multiple of 128 (full-extent block, no pad/slice round trip).
    kx, kp, key = jax.random.split(key, 3)
    B, C, H, W = 3, 32, 5, 7
    Hid = C // 16
    x = jax.random.normal(kx, (B, C, H, W), dtype=jnp.float32)
    w1, b1, w2, b2 = make_params(kp, C, Hid)
    out = channel_gate(x, w1, b1, w2, b2)
    jax.block_until_ready(out)
    ref = reference_channel_gate(x, w1, b1, w2, b2)
    assert jnp.allclose(out, ref, atol=1e-5, rtol=1e-5), "mismatch (test 2)"

    # Test 3: force the HW-tiled fallback path with a tiny budget (exercises the
    # masked partial HW tile too: 400 = 3*128 + 16).
    kx, kp, key = jax.random.split(key, 3)
    B, C, H, W = 2, 16, 20, 20
    Hid = C // 4
    x = jax.random.normal(kx, (B, C, H, W), dtype=jnp.float32)
    w1, b1, w2, b2 = make_params(kp, C, Hid)
    out = channel_gate(x, w1, b1, w2, b2, io_budget_bytes=32 * 1024)
    jax.block_until_ready(out)
    ref = reference_channel_gate(x, w1, b1, w2, b2)
    assert jnp.allclose(out, ref, atol=1e-5, rtol=1e-5), "mismatch (test 3)"

    print("KERNEL_OK")
</pallas_src>

<mosaic_0001>
module attributes {stable_mosaic.version = 11 : i64} {
  func.func @_channel_gate_kernel(%arg0: i32, %arg1: memref<2x32x256xf32, #tpu.memory_space<vmem>>, %arg2: memref<32x2xf32, #tpu.memory_space<vmem>>, %arg3: memref<1x2xf32, #tpu.memory_space<vmem>>, %arg4: memref<2x32xf32, #tpu.memory_space<vmem>>, %arg5: memref<1x32xf32, #tpu.memory_space<vmem>>, %arg6: memref<2x32x256xf32, #tpu.memory_space<vmem>>) attributes {dimension_semantics = [#tpu.dimension_semantics<parallel>], iteration_bounds = array<i64: 1>, scalar_prefetch = 0 : i64, scratch_operands = 0 : i64, tpu.core_type = #tpu.core_type<tc>, window_params = [{transform_indices = @transform_0, window_bounds = array<i64: 2, 32, 256>}, {pipeline_mode = #tpu.pipeline_mode<synchronous>, transform_indices = @transform_1, window_bounds = array<i64: 32, 2>}, {pipeline_mode = #tpu.pipeline_mode<synchronous>, transform_indices = @transform_2, window_bounds = array<i64: 1, 2>}, {pipeline_mode = #tpu.pipeline_mode<synchronous>, transform_indices = @transform_3, window_bounds = array<i64: 2, 32>}, {pipeline_mode = #tpu.pipeline_mode<synchronous>, transform_indices = @transform_4, window_bounds = array<i64: 1, 32>}, {transform_indices = @transform_5, window_bounds = array<i64: 2, 32, 256>}]} {
    %c0 = arith.constant 0 : index
    %c0_0 = arith.constant 0 : index
    %c0_1 = arith.constant 0 : index
    %0 = vector.load %arg1[%c0, %c0_0, %c0_1] : memref<2x32x256xf32, #tpu.memory_space<vmem>>, vector<2x32x256xf32>
    %cst = arith.constant dense<0.000000e+00> : vector<2x32xf32>
    %1 = vector.multi_reduction <add>, %0, %cst [2] : vector<2x32x256xf32> to vector<2x32xf32>
    %cst_2 = arith.constant dense<0xFF800000> : vector<2x32xf32>
    %2 = vector.multi_reduction <maximumf>, %0, %cst_2 [2] : vector<2x32x256xf32> to vector<2x32xf32>
    %cst_3 = arith.constant 3.906250e-03 : f32
    %3 = vector.broadcast %cst_3 : f32 to vector<2x32xf32>
    %4 = arith.mulf %1, %3 : vector<2x32xf32>
    %5 = tpu.concatenate %4, %2 in 0 : vector<2x32xf32>, vector<2x32xf32> -> vector<4x32xf32>
    %c0_4 = arith.constant 0 : index
    %c0_5 = arith.constant 0 : index
    %6 = vector.load %arg2[%c0_4, %c0_5] : memref<32x2xf32, #tpu.memory_space<vmem>>, vector<32x2xf32>
    %cst_6 = arith.constant dense<0.000000e+00> : vector<4x2xf32>
    %7 = tpu.matmul %5, %6, %cst_6 {dimension_numbers = #tpu.dot_dimension_numbers<[1], [0], [0], [1], [0, 0, 1, 1], [], []>} : vector<4x32xf32>, vector<32x2xf32>, vector<4x2xf32> -> vector<4x2xf32>
    %c0_7 = arith.constant 0 : index
    %c0_8 = arith.constant 0 : index
    %8 = vector.load %arg3[%c0_7, %c0_8] : memref<1x2xf32, #tpu.memory_space<vmem>>, vector<1x2xf32>
    %9 = vector.broadcast %8 : vector<1x2xf32> to vector<4x2xf32>
    %10 = arith.addf %7, %9 : vector<4x2xf32>
    %cst_9 = arith.constant 0.000000e+00 : f32
    %11 = vector.broadcast %cst_9 : f32 to vector<4x2xf32>
    %12 = arith.maximumf %10, %11 : vector<4x2xf32>
    %c0_10 = arith.constant 0 : index
    %c0_11 = arith.constant 0 : index
    %13 = vector.load %arg4[%c0_10, %c0_11] : memref<2x32xf32, #tpu.memory_space<vmem>>, vector<2x32xf32>
    %cst_12 = arith.constant dense<0.000000e+00> : vector<4x32xf32>
    %14 = tpu.matmul %12, %13, %cst_12 {dimension_numbers = #tpu.dot_dimension_numbers<[1], [0], [0], [1], [0, 0, 1, 1], [], []>} : vector<4x2xf32>, vector<2x32xf32>, vector<4x32xf32> -> vector<4x32xf32>
    %15 = vector.shape_cast %14 : vector<4x32xf32> to vector<2x2x32xf32>
    %cst_13 = arith.constant dense<0.000000e+00> : vector<2x32xf32>
    %16 = vector.multi_reduction <add>, %15, %cst_13 [0] : vector<2x2x32xf32> to vector<2x32xf32>
    %c0_14 = arith.constant 0 : index
    %c0_15 = arith.constant 0 : index
    %17 = vector.load %arg5[%c0_14, %c0_15] : memref<1x32xf32, #tpu.memory_space<vmem>>, vector<1x32xf32>
    %cst_16 = arith.constant 2.000000e+00 : f32
    %18 = vector.broadcast %cst_16 : f32 to vector<1x32xf32>
    %19 = arith.mulf %18, %17 : vector<1x32xf32>
    %20 = vector.broadcast %19 : vector<1x32xf32> to vector<2x32xf32>
    %21 = arith.addf %16, %20 : vector<2x32xf32>
    %22 = arith.negf %21 : vector<2x32xf32>
    %23 = math.exp %22 : vector<2x32xf32>
    %cst_17 = arith.constant 1.000000e+00 : f32
    %24 = vector.broadcast %cst_17 : f32 to vector<2x32xf32>
    %25 = arith.addf %24, %23 : vector<2x32xf32>
    %26 = arith.divf %24, %25 : vector<2x32xf32>
    %27 = vector.shape_cast %26 : vector<2x32xf32> to vector<2x32x1xf32>
    %28 = vector.broadcast %27 : vector<2x32x1xf32> to vector<2x32x256xf32>
    %29 = arith.mulf %0, %28 : vector<2x32x256xf32>
    %c0_18 = arith.constant 0 : index
    %c0_19 = arith.constant 0 : index
    %c0_20 = arith.constant 0 : index
    %30 = vector.load %arg6[%c0_18, %c0_19, %c0_20] : memref<2x32x256xf32, #tpu.memory_space<vmem>>, vector<2x32x256xf32>
    tpu.vector_store %arg6[%c0_18, %c0_19, %c0_20], %29 {strides = array<i32>} : memref<2x32x256xf32, #tpu.memory_space<vmem>>, vector<2x32x256xf32>,
    return
  }
  func.func @transform_0(%arg0: i32) -> (i32, i32, i32) {
    %c0_i32 = arith.constant 0 : i32
    %c0_i32_0 = arith.constant 0 : i32
    %c0_i32_1 = arith.constant 0 : i32
    return %arg0, %c0_i32, %c0_i32_0 : i32, i32, i32
  }
  func.func @transform_1(%arg0: i32) -> (i32, i32) {
    %c0_i32 = arith.constant 0 : i32
    %c0_i32_0 = arith.constant 0 : i32
    %c0_i32_1 = arith.constant 0 : i32
    return %c0_i32, %c0_i32_0 : i32, i32
  }
  func.func @transform_2(%arg0: i32) -> (i32, i32) {
    %c0_i32 = arith.constant 0 : i32
    %c0_i32_0 = arith.constant 0 : i32
    %c0_i32_1 = arith.constant 0 : i32
    return %c0_i32, %c0_i32_0 : i32, i32
  }
  func.func @transform_3(%arg0: i32) -> (i32, i32) {
    %c0_i32 = arith.constant 0 : i32
    %c0_i32_0 = arith.constant 0 : i32
    %c0_i32_1 = arith.constant 0 : i32
    return %c0_i32, %c0_i32_0 : i32, i32
  }
  func.func @transform_4(%arg0: i32) -> (i32, i32) {
    %c0_i32 = arith.constant 0 : i32
    %c0_i32_0 = arith.constant 0 : i32
    %c0_i32_1 = arith.constant 0 : i32
    return %c0_i32, %c0_i32_0 : i32, i32
  }
  func.func @transform_5(%arg0: i32) -> (i32, i32, i32) {
    %c0_i32 = arith.constant 0 : i32
    %c0_i32_0 = arith.constant 0 : i32
    %c0_i32_1 = arith.constant 0 : i32
    return %arg0, %c0_i32, %c0_i32_0 : i32, i32, i32
  }
}

</mosaic_0001>

<llo_original>
// kernel: tpu_custom_call.1
$region0: #{tpu_custom_call.1}
  #allocation0 [shape = 'u32[]', space=smem, size = 0x4, offset = 0x4, fixed_abs, tag = 'smem constant byte address 0x4 - core index']
  #allocation1 [shape = 'u32[144,128]{1,0:T(1,128)}', space=vmem, size = 0x12000, scoped, tag = 'internal scratch']
  %s0 = inlined_call_operand.hbm [shape: f32[2,32,256], index: 0, kind: input, shape index: {}]
  %s1 = inlined_call_operand.vmem [shape: f32[32,2], index: 1, kind: input, shape index: {}]
  %s2 = inlined_call_operand.vmem [shape: f32[1,2], index: 2, kind: input, shape index: {}]
  %s3 = inlined_call_operand.vmem [shape: f32[2,32], index: 3, kind: input, shape index: {}]
  %s4 = inlined_call_operand.vmem [shape: f32[1,32], index: 4, kind: input, shape index: {}]
  %s5 = inlined_call_operand.hbm [shape: f32[2,32,256], index: 5, kind: output, shape index: {}]
  %s6 = sld [smem:[#allocation0]]
  $region34: #{tpu_custom_call.1} parent=0
    _
  %s8 = ssub.s32 1, %s6
  %s9 = scalar_select 0, %s8, %s6
  $region1: #{tpu_custom_call.1} parent=0
    #allocation2 [shape = 'u8[65536]{0}', space=vmem, size = 0x10000, scoped, tag = 'input window, operand 0, single buffered']
    #allocation3 [shape = 's32[1]{0}', space=sflag, size = 0x4, scoped, tag = 'scoped memory for tpu_custom_call.1']
    #allocation4 [shape = 's32[1]{0}', space=sflag, size = 0x4, scoped, tag = 'scoped memory for tpu_custom_call.1']
    #allocation5 [shape = 'u8[65536]{0}', space=vmem, size = 0x10000, scoped, tag = 'output window, operand 0, single buffered']
    %10 = vsyncpa [#allocation3], 0
    %11 = vsyncpa [#allocation4], 0
    // Predicated region
    $region2: #{tpu_custom_call.1} parent=1 // pred_check
      _
    $region3: #{tpu_custom_call.1} parent=1 // pred_check_branch
      %13 = sbr.rel (0) target = $region5
    $region4: #{tpu_custom_call.1} parent=1 // pred_region
      %s15 = ssub.s32 2048, 2048
      %16 = vsyncadd [#allocation3], %s15
      %s17 = sshll.u32 [#allocation2], 4
      %s18 = int_to_ptr.vmem [resolvable:$true] %s17
      %23 = dma.hbm_to_vmem [thread:$0]  %s0, 2048, %s18, [#allocation3], 256, 256, 16
    $region5: #{tpu_custom_call.1} parent=1 // pred_fallthru
      _
    // Predicated region
    $region6: #{tpu_custom_call.1} parent=1 // pred_check
      _
    $region7: #{tpu_custom_call.1} parent=1 // pred_check_branch
      %25 = sbr.rel (0) target = $region9
    $region8: #{tpu_custom_call.1} parent=1 // pred_region
      _
    $region9: #{tpu_custom_call.1} parent=1 // pred_fallthru
      _
    // Predicated region
    $region10: #{tpu_custom_call.1} parent=1 // pred_check
      _
    $region11: #{tpu_custom_call.1} parent=1 // pred_check_branch
      %27 = sbr.rel (0) target = $region13
    $region12: #{tpu_custom_call.1} parent=1 // pred_region
      _
    $region13: #{tpu_custom_call.1} parent=1 // pred_fallthru
      _
    // Predicated region
    $region14: #{tpu_custom_call.1} parent=1 // pred_check
      _
    $region15: #{tpu_custom_call.1} parent=1 // pred_check_branch
      %29 = sbr.rel (0) target = $region17
    $region16: #{tpu_custom_call.1} parent=1 // pred_region
      _
    $region17: #{tpu_custom_call.1} parent=1 // pred_fallthru
      _
    // Predicated region
    $region18: #{tpu_custom_call.1} parent=1 // pred_check
      _
    $region19: #{tpu_custom_call.1} parent=1 // pred_check_branch
      %31 = sbr.rel (0) target = $region21
    $region20: #{tpu_custom_call.1} parent=1 // pred_region
      _
    $region21: #{tpu_custom_call.1} parent=1 // pred_fallthru
      _
    // Predicated region
    $region22: #{tpu_custom_call.1} parent=1 // pred_check
      _
    $region23: #{tpu_custom_call.1} parent=1 // pred_check_branch
      %33 = sbr.rel (0) target = $region25
    $region24: #{tpu_custom_call.1} parent=1 // pred_region
      %34 = dma.done [#allocation3], 2048
    $region25: #{tpu_custom_call.1} parent=1 // pred_fallthru
      _
    %v35 = vld [vmem:[#allocation2] sm:$0xff]
    %v36 = vld [vmem:[#allocation2 + $0x8] sm:$0xff]
    %v37 = vld [vmem:[#allocation2 + $0x10] sm:$0xff]
    %v38 = vld [vmem:[#allocation2 + $0x18] sm:$0xff]
    %v39 = vld [vmem:[#allocation2 + $0x20] sm:$0xff]
    %v40 = vld [vmem:[#allocation2 + $0x28] sm:$0xff]
    %v41 = vld [vmem:[#allocation2 + $0x30] sm:$0xff]
    %v42 = vld [vmem:[#allocation2 + $0x38] sm:$0xff]
    %v43 = vld [vmem:[#allocation2 + $0x40] sm:$0xff]
    %v44 = vld [vmem:[#allocation2 + $0x48] sm:$0xff]
    %v45 = vld [vmem:[#allocation2 + $0x50] sm:$0xff]
    %v46 = vld [vmem:[#allocation2 + $0x58] sm:$0xff]
    %v47 = vld [vmem:[#allocation2 + $0x60] sm:$0xff]
    %v48 = vld [vmem:[#allocation2 + $0x68] sm:$0xff]
    %v49 = vld [vmem:[#allocation2 + $0x70] sm:$0xff]
    %v50 = vld [vmem:[#allocation2 + $0x78] sm:$0xff]
    %v51 = vadd.f32 %v35, %v36
    %52 = vadd.xlane.f32.xlu0 %v51
    %v53 = vpop.xlane.xlu0 %52
    %v54 = vadd.f32 %v37, %v38
    %55 = vadd.xlane.f32.xlu0 %v54
    %v56 = vpop.xlane.xlu0 %55
    %v57 = vadd.f32 %v39, %v40
    %58 = vadd.xlane.f32.xlu0 %v57
    %v59 = vpop.xlane.xlu0 %58
    %v60 = vadd.f32 %v41, %v42
    %61 = vadd.xlane.f32.xlu0 %v60
    %v62 = vpop.xlane.xlu0 %61
    %v63 = vadd.f32 %v43, %v44
    %64 = vadd.xlane.f32.xlu0 %v63
    %v65 = vpop.xlane.xlu0 %64
    %v66 = vadd.f32 %v45, %v46
    %67 = vadd.xlane.f32.xlu0 %v66
    %v68 = vpop.xlane.xlu0 %67
    %v69 = vadd.f32 %v47, %v48
    %70 = vadd.xlane.f32.xlu0 %v69
    %v71 = vpop.xlane.xlu0 %70
    %v72 = vadd.f32 %v49, %v50
    %73 = vadd.xlane.f32.xlu0 %v72
    %v74 = vpop.xlane.xlu0 %73
    %v75 = vmax.f32 %v35, %v36
    %76 = vmax.xlane.f32.xlu0 %v75
    %v77 = vpop.xlane.xlu0 %76
    %v78 = vmax.f32 %v37, %v38
    %79 = vmax.xlane.f32.xlu0 %v78
    %v80 = vpop.xlane.xlu0 %79
    %v81 = vmax.f32 %v39, %v40
    %82 = vmax.xlane.f32.xlu0 %v81
    %v83 = vpop.xlane.xlu0 %82
    %v84 = vmax.f32 %v41, %v42
    %85 = vmax.xlane.f32.xlu0 %v84
    %v86 = vpop.xlane.xlu0 %85
    %v87 = vmax.f32 %v43, %v44
    %88 = vmax.xlane.f32.xlu0 %v87
    %v89 = vpop.xlane.xlu0 %88
    %v90 = vmax.f32 %v45, %v46
    %91 = vmax.xlane.f32.xlu0 %v90
    %v92 = vpop.xlane.xlu0 %91
    %v93 = vmax.f32 %v47, %v48
    %94 = vmax.xlane.f32.xlu0 %v93
    %v95 = vpop.xlane.xlu0 %94
    %v96 = vmax.f32 %v49, %v50
    %97 = vmax.xlane.f32.xlu0 %v96
    %v98 = vpop.xlane.xlu0 %97
    %v99 = vmul.f32 %v53, 0.00390625
    %v100 = vmul.f32 %v56, 0.00390625
    %v101 = vmul.f32 %v59, 0.00390625
    %v102 = vmul.f32 %v62, 0.00390625
    %v103 = vmul.f32 %v65, 0.00390625
    %v104 = vmul.f32 %v68, 0.00390625
    %v105 = vmul.f32 %v71, 0.00390625
    %v106 = vmul.f32 %v74, 0.00390625
    %v115 = vlaneseq
    %v116 = vand.u32 %v115, 127
    %v117 = vlaneseq
    %v118 = vshrl.u32 %v117, 7
    %v119 = vsub.s32 %v116, %v118
    %v120 = vrot.slane %v99, %v119
    %v121 = vadd.s32 %v116, 4294967288
    %v122 = vlaneseq
    %v123 = vshrl.u32 %v122, 7
    %v124 = vsub.s32 %v121, %v123
    %v125 = vrot.slane %v100, %v124
    %vm126 = vcmask 130112
    %v127 = vsel %vm126, %v125, %v120
    %v128 = vadd.s32 %v116, 4294967280
    %v129 = vlaneseq
    %v130 = vshrl.u32 %v129, 7
    %v131 = vsub.s32 %v128, %v130
    %v132 = vrot.slane %v101, %v131
    %vm133 = vcmask 195712
    %v134 = vsel %vm133, %v132, %v127
    %v135 = vadd.s32 %v116, 4294967272
    %v136 = vlaneseq
    %v137 = vshrl.u32 %v136, 7
    %v138 = vsub.s32 %v135, %v137
    %v139 = vrot.slane %v102, %v138
    %vm140 = vcmask 261312
    %v141 = vsel %vm140, %v139, %v134
    %v142 = vlaneseq
    %v143 = vshrl.u32 %v142, 7
    %v144 = vsub.s32 %v116, %v143
    %v145 = vrot.slane %v103, %v144
    %v146 = vlaneseq
    %v147 = vshrl.u32 %v146, 7
    %v148 = vsub.s32 %v121, %v147
    %v149 = vrot.slane %v104, %v148
    %v150 = vsel %vm126, %v149, %v145
    %v151 = vlaneseq
    %v152 = vshrl.u32 %v151, 7
    %v153 = vsub.s32 %v128, %v152
    %v154 = vrot.slane %v105, %v153
    %v155 = vsel %vm133, %v154, %v150
    %v156 = vlaneseq
    %v157 = vshrl.u32 %v156, 7
    %v158 = vsub.s32 %v135, %v157
    %v159 = vrot.slane %v106, %v158
    %v160 = vsel %vm140, %v159, %v155
    %vm161 = vcmask 1041409
    %v162 = vsel %vm161, %v160, %v141
    %v172 = vlaneseq
    %v173 = vshrl.u32 %v172, 7
    %v174 = vsub.s32 %v116, %v173
    %v175 = vrot.slane %v77, %v174
    %v176 = vlaneseq
    %v177 = vshrl.u32 %v176, 7
    %v178 = vsub.s32 %v121, %v177
    %v179 = vrot.slane %v80, %v178
    %v180 = vsel %vm126, %v179, %v175
    %v181 = vlaneseq
    %v182 = vshrl.u32 %v181, 7
    %v183 = vsub.s32 %v128, %v182
    %v184 = vrot.slane %v83, %v183
    %v185 = vsel %vm133, %v184, %v180
    %v186 = vlaneseq
    %v187 = vshrl.u32 %v186, 7
    %v188 = vsub.s32 %v135, %v187
    %v189 = vrot.slane %v86, %v188
    %v190 = vsel %vm140, %v189, %v185
    %v191 = vlaneseq
    %v192 = vshrl.u32 %v191, 7
    %v193 = vsub.s32 %v116, %v192
    %v194 = vrot.slane %v89, %v193
    %v195 = vlaneseq
    %v196 = vshrl.u32 %v195, 7
    %v197 = vsub.s32 %v121, %v196
    %v198 = vrot.slane %v92, %v197
    %v199 = vsel %vm126, %v198, %v194
    %v200 = vlaneseq
    %v201 = vshrl.u32 %v200, 7
    %v202 = vsub.s32 %v128, %v201
    %v203 = vrot.slane %v95, %v202
    %v204 = vsel %vm133, %v203, %v199
    %v205 = vlaneseq
    %v206 = vshrl.u32 %v205, 7
    %v207 = vsub.s32 %v135, %v206
    %v208 = vrot.slane %v98, %v207
    %v209 = vsel %vm140, %v208, %v204
    %vm210 = vcmask 1043459
    %v211 = vsel %vm210, %v209, %v190
    %vm213 = vcmask 1041408
    %v214 = vsel %vm213, %v162, %v211
    %v215 = vld [vmem:[%s1] sm:$0xff]
    %v216 = vld [vmem:[%s1 + $0x8] sm:$0xff]
    %v217 = vld [vmem:[%s1 + $0x10] sm:$0xff]
    %v218 = vld [vmem:[%s1 + $0x18] sm:$0xff]
    %v219 = vld [vmem:[%s2] sm:$0x1]
    %v221 = vlaneseq
    %v222 = vshrl.u32 %v221, 7
    %v223 = vsub.s32 0, %v222
    %v224 = vrot.slane %v219, %v223
    %vm226 = vcmask 261120
    %v228 = vsel %vm226, %v214, 0
    %230 = vmatprep.subr.mxu0 0.0
    %231 = vmatpush1.msra.mxu0 %v215
    %232 = vmatprep.subr.mxu0 0.0
    %233 = vmatpush1.msra.mxu0 %v216
    %234 = vmatprep.subr.mxu0 0.0
    %235 = vmatpush1.msra.mxu0 %v217
    %236 = vmatprep.subr.mxu0 0.0
    %237 = vmatpush1.msra.mxu0 %v218
    %238 = vmatprep.subr.mxu0 0.0
    %239 = vmatpush1.msra.mxu0 0.0
    %240 = vmatprep.subr.mxu0 0.0
    %241 = vmatpush1.msra.mxu0 0.0
    %242 = vmatprep.subr.mxu0 0.0
    %243 = vmatpush1.msra.mxu0 0.0
    %244 = vmatprep.subr.mxu0 0.0
    %245 = vmatpush1.msra.mxu0 0.0
    %246 = vmatprep.subr.mxu0 0.0
    %247 = vmatpush1.msra.mxu0 0.0
    %248 = vmatprep.subr.mxu0 0.0
    %249 = vmatpush1.msra.mxu0 0.0
    %250 = vmatprep.subr.mxu0 0.0
    %251 = vmatpush1.msra.mxu0 0.0
    %252 = vmatprep.subr.mxu0 0.0
    %253 = vmatpush1.msra.mxu0 0.0
    %254 = vmatprep.subr.mxu0 0.0
    %255 = vmatpush1.msra.mxu0 0.0
    %256 = vmatprep.subr.mxu0 0.0
    %257 = vmatpush1.msra.mxu0 0.0
    %258 = vmatprep.subr.mxu0 0.0
    %259 = vmatpush1.msra.mxu0 0.0
    %260 = vmatprep.subr.mxu0 0.0
    %261 = vmatpush1.msra.mxu0 0.0
    %262 = vmatprep.subr.mxu0 0.0
    %263 = vmatpush1.msra.mxu0 0.0
    %264 = vmatprep.subr.mxu0 0.0
    %265 = vmatpush1.msra.mxu0 0.0
    %266 = vmatprep.subr.mxu0 0.0
    %267 = vmatpush1.msra.mxu0 0.0
    %268 = vmatprep.subr.mxu0 0.0
    %269 = vmatpush1.msra.mxu0 0.0
    %270 = vmatprep.subr.mxu0 0.0
    %271 = vmatpush1.msra.mxu0 0.0
    %272 = vmatprep.subr.mxu0 0.0
    %273 = vmatpush1.msra.mxu0 0.0
    %274 = vmatprep.subr.mxu0 0.0
    %275 = vmatpush1.msra.mxu0 0.0
    %276 = vmatprep.subr.mxu0 0.0
    %277 = vmatpush1.msra.mxu0 0.0
    %278 = vmatprep.subr.mxu0 0.0
    %279 = vmatpush1.msra.mxu0 0.0
    %280 = vmatprep.subr.mxu0 0.0
    %281 = vmatpush1.msra.mxu0 0.0
    %282 = vmatprep.subr.mxu0 0.0
    %283 = vmatpush1.msra.mxu0 0.0
    %284 = vmatprep.subr.mxu0 0.0
    %285 = vmatpush1.msra.mxu0 0.0
    %286 = vmatprep.subr.mxu0 0.0
    %287 = vmatpush1.msra.mxu0 0.0
    %288 = vmatprep.subr.mxu0 0.0
    %289 = vmatpush1.msra.mxu0 0.0
    %290 = vmatprep.subr.mxu0 0.0
    %291 = vmatpush1.msra.mxu0 0.0
    %292 = vmatprep.subr.mxu0 0.0
    %293 = vmatpush1.msra.mxu0 0.0
    %294 = vmatprep.mubr.f32.mxu0 0.0
    %295 = vmatmul.mubr.f32.gmra.mrb[0].mxu0 %v228
    %v296 = vpop.f32.mrb[0].mxu0
    %v297 = vadd.f32 %v224, %v296
    %v298 = vpop.f32.mrb[0].mxu0
    %299 = vdwg.mxu0
    %v300 = vmax.f32 %v297, 0.0
    %v301 = vld [vmem:[%s3] sm:$0x3]
    %vm302 = vcmask 15360
    %v304 = vsel %vm302, %v300, 0
    %v307 = vsel %vm213, %v301, 0
    %309 = vmatprep.subr.mxu0 0.0
    %310 = vmatpush1.msra.mxu0 %v307
    %311 = vmatprep.subr.mxu0 0.0
    %312 = vmatpush1.msra.mxu0 0.0
    %313 = vmatprep.subr.mxu0 0.0
    %314 = vmatpush1.msra.mxu0 0.0
    %315 = vmatprep.subr.mxu0 0.0
    %316 = vmatpush1.msra.mxu0 0.0
    %317 = vmatprep.subr.mxu0 0.0
    %318 = vmatpush1.msra.mxu0 0.0
    %319 = vmatprep.subr.mxu0 0.0
    %320 = vmatpush1.msra.mxu0 0.0
    %321 = vmatprep.subr.mxu0 0.0
    %322 = vmatpush1.msra.mxu0 0.0
    %323 = vmatprep.subr.mxu0 0.0
    %324 = vmatpush1.msra.mxu0 0.0
    %325 = vmatprep.subr.mxu0 0.0
    %326 = vmatpush1.msra.mxu0 0.0
    %327 = vmatprep.subr.mxu0 0.0
    %328 = vmatpush1.msra.mxu0 0.0
    %329 = vmatprep.subr.mxu0 0.0
    %330 = vmatpush1.msra.mxu0 0.0
    %331 = vmatprep.subr.mxu0 0.0
    %332 = vmatpush1.msra.mxu0 0.0
    %333 = vmatprep.subr.mxu0 0.0
    %334 = vmatpush1.msra.mxu0 0.0
    %335 = vmatprep.subr.mxu0 0.0
    %336 = vmatpush1.msra.mxu0 0.0
    %337 = vmatprep.subr.mxu0 0.0
    %338 = vmatpush1.msra.mxu0 0.0
    %339 = vmatprep.subr.mxu0 0.0
    %340 = vmatpush1.msra.mxu0 0.0
    %341 = vmatprep.subr.mxu0 0.0
    %342 = vmatpush1.msra.mxu0 0.0
    %343 = vmatprep.subr.mxu0 0.0
    %344 = vmatpush1.msra.mxu0 0.0
    %345 = vmatprep.subr.mxu0 0.0
    %346 = vmatpush1.msra.mxu0 0.0
    %347 = vmatprep.subr.mxu0 0.0
    %348 = vmatpush1.msra.mxu0 0.0
    %349 = vmatprep.subr.mxu0 0.0
    %350 = vmatpush1.msra.mxu0 0.0
    %351 = vmatprep.subr.mxu0 0.0
    %352 = vmatpush1.msra.mxu0 0.0
    %353 = vmatprep.subr.mxu0 0.0
    %354 = vmatpush1.msra.mxu0 0.0
    %355 = vmatprep.subr.mxu0 0.0
    %356 = vmatpush1.msra.mxu0 0.0
    %357 = vmatprep.subr.mxu0 0.0
    %358 = vmatpush1.msra.mxu0 0.0
    %359 = vmatprep.subr.mxu0 0.0
    %360 = vmatpush1.msra.mxu0 0.0
    %361 = vmatprep.subr.mxu0 0.0
    %362 = vmatpush1.msra.mxu0 0.0
    %363 = vmatprep.subr.mxu0 0.0
    %364 = vmatpush1.msra.mxu0 0.0
    %365 = vmatprep.subr.mxu0 0.0
    %366 = vmatpush1.msra.mxu0 0.0
    %367 = vmatprep.subr.mxu0 0.0
    %368 = vmatpush1.msra.mxu0 0.0
    %369 = vmatprep.subr.mxu0 0.0
    %370 = vmatpush1.msra.mxu0 0.0
    %371 = vmatprep.subr.mxu0 0.0
    %372 = vmatpush1.msra.mxu0 0.0
    %373 = vmatprep.mubr.f32.mxu0 0.0
    %374 = vmatmul.mubr.f32.gmra.mrb[0].mxu0 %v304
    %v375 = vpop.f32.mrb[0].mxu0
    %v376 = vadd.f32 0.0, %v375
    %v377 = vpop.f32.mrb[0].mxu0
    %378 = vdwg.mxu0
    %v381 = vunpack.c.l.s4 1983009808
    %v382 = vunpack.c.0.s8 %v381
    %v383 = vlaneseq
    %v384 = vshrl.u32 %v383, 7
    %v385 = vsub.s32 %v382, %v384
    %v386 = vrot.slane %v376, %v385
    %v387 = vcombine.high %v386, %v386
    %vm390 = vcmask 254976
    %v391 = vsel %vm390, %v386, 0.0
    %v392 = vsel %vm390, %v387, 0.0
    %v393 = vadd.f32 %v391, %v392
    %v394 = vld [vmem:[%s4] sm:$0x1]
    %v395 = vmul.f32 %v394, 2.0
    %v397 = vlaneseq
    %v398 = vshrl.u32 %v397, 7
    %v399 = vsub.s32 0, %v398
    %v400 = vrot.slane %v395, %v399
    %v402 = vadd.f32 %v393, %v400
    %v403 = vxor.u32 %v402, 2147483648
    %v404 = vmul.f32 %v403, 1.442695
    %v405 = vpow.pop %v404
    %v406 = vadd.f32 %v405, 1.0
    %v407 = vrcp.pop %v406
    %v408 = vmul.f32 1.0, %v407
    %v409 = vlaneseq
    %v410 = vshrl.u32 %v409, 7
    %v411 = vsub.s32 0, %v410
    %v412 = vrot.slane %v408, %v411
    %414 = vbcast.lane.b32.xlu0 %v412, 256
    %v415 = vpop.permute.xlu0 %414
    %s417 = sor.u32 256, 8
    %418 = vbcast.lane.b32.xlu0 %v412, %s417
    %v419 = vpop.permute.xlu0 %418
    %s421 = sor.u32 256, 16
    %422 = vbcast.lane.b32.xlu0 %v412, %s421
    %v423 = vpop.permute.xlu0 %422
    %s425 = sor.u32 256, 24
    %426 = vbcast.lane.b32.xlu0 %v412, %s425
    %v427 = vpop.permute.xlu0 %426
    %v428 = vlaneseq
    %v429 = vshrl.u32 %v428, 7
    %v430 = vsub.s32 1, %v429
    %v431 = vrot.slane %v408, %v430
    %433 = vbcast.lane.b32.xlu0 %v431, 256
    %v434 = vpop.permute.xlu0 %433
    %s436 = sor.u32 256, 8
    %437 = vbcast.lane.b32.xlu0 %v431, %s436
    %v438 = vpop.permute.xlu0 %437
    %s440 = sor.u32 256, 16
    %441 = vbcast.lane.b32.xlu0 %v431, %s440
    %v442 = vpop.permute.xlu0 %441
    %s444 = sor.u32 256, 24
    %445 = vbcast.lane.b32.xlu0 %v431, %s444
    %v446 = vpop.permute.xlu0 %445
    %v447 = vmul.f32 %v35, %v415
    %v448 = vmul.f32 %v36, %v415
    %v449 = vmul.f32 %v37, %v419
    %v450 = vmul.f32 %v38, %v419
    %v451 = vmul.f32 %v39, %v423
    %v452 = vmul.f32 %v40, %v423
    %v453 = vmul.f32 %v41, %v427
    %v454 = vmul.f32 %v42, %v427
    %v455 = vmul.f32 %v43, %v434
    %v456 = vmul.f32 %v44, %v434
    %v457 = vmul.f32 %v45, %v438
    %v458 = vmul.f32 %v46, %v438
    %v459 = vmul.f32 %v47, %v442
    %v460 = vmul.f32 %v48, %v442
    %v461 = vmul.f32 %v49, %v446
    %v462 = vmul.f32 %v50, %v446
    %463 = vst [vmem:[#allocation5] sm:$0xff] %v447
    %464 = vst [vmem:[#allocation5 + $0x8] sm:$0xff] %v448
    %465 = vst [vmem:[#allocation5 + $0x10] sm:$0xff] %v449
    %466 = vst [vmem:[#allocation5 + $0x18] sm:$0xff] %v450
    %467 = vst [vmem:[#allocation5 + $0x20] sm:$0xff] %v451
    %468 = vst [vmem:[#allocation5 + $0x28] sm:$0xff] %v452
    %469 = vst [vmem:[#allocation5 + $0x30] sm:$0xff] %v453
    %470 = vst [vmem:[#allocation5 + $0x38] sm:$0xff] %v454
    %471 = vst [vmem:[#allocation5 + $0x40] sm:$0xff] %v455
    %472 = vst [vmem:[#allocation5 + $0x48] sm:$0xff] %v456
    %473 = vst [vmem:[#allocation5 + $0x50] sm:$0xff] %v457
    %474 = vst [vmem:[#allocation5 + $0x58] sm:$0xff] %v458
    %475 = vst [vmem:[#allocation5 + $0x60] sm:$0xff] %v459
    %476 = vst [vmem:[#allocation5 + $0x68] sm:$0xff] %v460
    %477 = vst [vmem:[#allocation5 + $0x70] sm:$0xff] %v461
    %478 = vst [vmem:[#allocation5 + $0x78] sm:$0xff] %v462
    // Predicated region
    $region26: #{tpu_custom_call.1} parent=1 // pred_check
      _
    $region27: #{tpu_custom_call.1} parent=1 // pred_check_branch
      %480 = sbr.rel (0) target = $region29
    $region28: #{tpu_custom_call.1} parent=1 // pred_region
      %s482 = ssub.s32 2048, 2048
      %483 = vsyncadd [#allocation4], %s482
      %s484 = sshll.u32 [#allocation5], 4
      %s485 = int_to_ptr.vmem [resolvable:$true] %s484
      %490 = dma.vmem_to_hbm [thread:$0]  %s485, 2048, %s5, [#allocation4], 256, 256, 16
    $region29: #{tpu_custom_call.1} parent=1 // pred_fallthru
      _
    // Predicated region
    $region30: #{tpu_custom_call.1} parent=1 // pred_check
      _
    $region31: #{tpu_custom_call.1} parent=1 // pred_check_branch
      %492 = sbr.rel (0) target = $region33
    $region32: #{tpu_custom_call.1} parent=1 // pred_region
      %493 = dma.done [#allocation4], 2048
    $region33: #{tpu_custom_call.1} parent=1 // pred_fallthru
      _
    %494 = vsyncpa [#allocation3], 1
    %495 = vsyncpa [#allocation4], 1

</llo_original>
